<compile_context>
chip_gen: v7x
topology: tpu7x:2x2x1
jax: 0.10.0
libtpu: 0.0.40
codegen_flags: <defaults>
</compile_context>

<pallas_src>
import jax
import jax.numpy as jnp
from jax import lax
from jax.experimental import pallas as pl
from jax.experimental.pallas import tpu as pltpu


# 32-row granule covers (8,128) f32, (16,128) bf16 and (32,128) int8/fp8
# sublane tiling, so any table dtype satisfies the block-shape constraints.
_GRANULE = 32
_MIN_SPLIT = 1024  # batches >= this always get >= 2 grid steps (v7x megacore)


def _round_up(x, m):
    return ((x + m - 1) // m) * m


def _vmem_capacity_bytes(default=64 << 20):
    try:
        return int(pltpu.get_tpu_info().vmem_capacity_bytes)
    except Exception:  # interpret mode / older runtimes
        return default


def _pick_batch_tiling(batch, bytes_per_row, per_buffer_target):
    """Balanced batch tiling.

    Pads the batch to a 32-row granule, splits it into tiles of roughly
    `per_buffer_target` bytes, and forces >= 2 tiles for medium/large batches
    so both v7x TensorCores get work.  Returns (padded_batch, tile_rows,
    num_tiles) with padded_batch == tile_rows * num_tiles.
    """
    b = _round_up(max(int(batch), 1), _GRANULE)
    cap_rows = max(
        _GRANULE,
        (per_buffer_target // max(int(bytes_per_row), 1)) // _GRANULE * _GRANULE,
    )
    n_tiles = pl.cdiv(b, cap_rows)
    if n_tiles == 1 and b >= _MIN_SPLIT:
        n_tiles = 2
    tb = _round_up(pl.cdiv(b, n_tiles), _GRANULE)
    n_tiles = pl.cdiv(b, tb)
    return n_tiles * tb, tb, n_tiles


# --------------------------------------------------------------------------
# Streaming path: XLA row gather (no transpose) + Pallas multiply/reduce.
# --------------------------------------------------------------------------
def _mf_stream_kernel(u_ref, v_ref, o_ref):
    # u_ref / v_ref: (TB, D) gathered embedding tiles in the table dtype;
    # o_ref: (TB, 1) f32.  Upcast to f32 inside the kernel so bf16 tables only
    # pay bf16 bytes on the HBM/DMA path (v5e VPU has no bf16 anyway).
    u = u_ref[...].astype(jnp.float32)
    v = v_ref[...].astype(jnp.float32)
    o_ref[...] = jnp.sum(u * v, axis=1, keepdims=True)


def _mf_forward_streaming(user_emb, item_emb, uidx, iidx, vmem_cap):
    _, d = user_emb.shape
    b = uidx.shape[0]
    itemsize = jnp.dtype(user_emb.dtype).itemsize

    # ~6 MiB per double-buffered input block (review: 6-8 MiB on v7x, 4-6 MiB
    # on v6e; extra size is harmless on v5e where the step overhead is already
    # negligible).
    b_pad, tb, n_tiles = _pick_batch_tiling(b, d * itemsize,
                                            per_buffer_target=6 << 20)
    pad = b_pad - b
    uidx = jnp.pad(uidx, (0, pad))  # index 0 is always valid; sliced off below
    iidx = jnp.pad(iidx, (0, pad))

    # Contiguous row gather stays in XLA; NO transpose of the gathered arrays.
    u_g = jnp.take(user_emb, uidx, axis=0)  # (B_pad, D), table dtype
    v_g = jnp.take(item_emb, iidx, axis=0)

    buf_bytes = 2 * 2 * tb * d * itemsize + 2 * tb * 4  # 2 inputs x 2 buffers + out
    vmem_limit = int(min(max(32 << 20, 2 * buf_bytes),
                         max(vmem_cap - (16 << 20), 32 << 20)))

    out = pl.pallas_call(
        _mf_stream_kernel,
        out_shape=jax.ShapeDtypeStruct((b_pad, 1), jnp.float32),
        grid_spec=pltpu.PrefetchScalarGridSpec(
            num_scalar_prefetch=0,
            grid=(n_tiles,),
            in_specs=[
                pl.BlockSpec((tb, d), lambda i: (i, 0)),
                pl.BlockSpec((tb, d), lambda i: (i, 0)),
            ],
            out_specs=pl.BlockSpec((tb, 1), lambda i: (i, 0)),
        ),
        compiler_params=pltpu.CompilerParams(
            dimension_semantics=("parallel",),
            vmem_limit_bytes=vmem_limit,
        ),
        cost_estimate=pl.CostEstimate(
            flops=2 * b_pad * d,
            transcendentals=0,
            bytes_accessed=2 * b_pad * d * itemsize + b_pad * 4,
        ),
    )(u_g, v_g)
    return out[:b, 0]


# --------------------------------------------------------------------------
# Fused path: tables resident in VMEM, gather done in-kernel (one-hot MXU).
# --------------------------------------------------------------------------
def _mf_fused_kernel(uidx_ref, iidx_ref, uemb_ref, iemb_ref, o_ref):
    # uidx_ref / iidx_ref: (TB, 1) int32 batch indices.
    # uemb_ref / iemb_ref: full embedding tables resident in VMEM.
    # o_ref: (TB, 1) f32 ratings.
    tb = o_ref.shape[0]
    nu = uemb_ref.shape[0]
    ni = iemb_ref.shape[0]

    # One-hot gather on the MXU (VPU compare + MXU matmul); exact row select
    # for <=16-bit tables, ~bf16-rounded for f32 tables under default matmul
    # precision (see module docstring).
    u_oh = (lax.broadcasted_iota(jnp.int32, (tb, nu), 1)
            == uidx_ref[...]).astype(uemb_ref.dtype)
    i_oh = (lax.broadcasted_iota(jnp.int32, (tb, ni), 1)
            == iidx_ref[...]).astype(iemb_ref.dtype)
    u = jnp.dot(u_oh, uemb_ref[...], preferred_element_type=jnp.float32)
    v = jnp.dot(i_oh, iemb_ref[...], preferred_element_type=jnp.float32)
    o_ref[...] = jnp.sum(u * v, axis=1, keepdims=True)


def _mf_forward_fused(user_emb, item_emb, uidx, iidx, vmem_cap):
    num_users, d = user_emb.shape
    num_items, _ = item_emb.shape
    b = uidx.shape[0]
    itemsize = jnp.dtype(user_emb.dtype).itemsize
    n_max = max(num_users, num_items)

    # Keep the in-kernel (TB, num_rows) one-hot temporaries around ~1 MiB.
    b_pad, tb, n_tiles = _pick_batch_tiling(b, n_max * 4,
                                            per_buffer_target=1 << 20)
    pad = b_pad - b
    uidx = jnp.pad(uidx, (0, pad)).reshape(b_pad, 1)
    iidx = jnp.pad(iidx, (0, pad)).reshape(b_pad, 1)

    table_bytes = 2 * (num_users + num_items) * d * itemsize   # double-buffered
    onehot_bytes = 2 * tb * (num_users + num_items) * 4
    need = table_bytes + onehot_bytes + 8 * tb * 4 + (4 << 20)
    vmem_limit = int(min(max(32 << 20, 2 * need),
                         max(vmem_cap - (16 << 20), 32 << 20)))

    out = pl.pallas_call(
        _mf_fused_kernel,
        out_shape=jax.ShapeDtypeStruct((b_pad, 1), jnp.float32),
        grid_spec=pltpu.PrefetchScalarGridSpec(
            num_scalar_prefetch=0,
            grid=(n_tiles,),
            in_specs=[
                pl.BlockSpec((tb, 1), lambda i: (i, 0)),
                pl.BlockSpec((tb, 1), lambda i: (i, 0)),
                pl.BlockSpec((num_users, d), lambda i: (0, 0)),  # resident
                pl.BlockSpec((num_items, d), lambda i: (0, 0)),  # resident
            ],
            out_specs=pl.BlockSpec((tb, 1), lambda i: (i, 0)),
        ),
        compiler_params=pltpu.CompilerParams(
            dimension_semantics=("parallel",),
            vmem_limit_bytes=vmem_limit,
        ),
        cost_estimate=pl.CostEstimate(
            flops=2 * b_pad * d * (num_users + num_items) + 2 * b_pad * d,
            transcendentals=0,
            bytes_accessed=((num_users + num_items) * d * itemsize
                            + 2 * b_pad * 4 + b_pad * 4),
        ),
    )(uidx, iidx, user_emb, item_emb)
    return out[:b, 0]


# --------------------------------------------------------------------------
# Public forward.
# --------------------------------------------------------------------------
def mf_forward(user_emb, item_emb, user_indices, item_indices, *, fuse=None):
    """Forward pass of MatrixFactorization.

    user_emb : (num_users, D)  embedding table (f32 or bf16)
    item_emb : (num_items, D)  embedding table
    user_indices, item_indices : (B,) integer indices
    returns  : (B,) f32 ratings
    """
    if user_emb.ndim != 2 or item_emb.ndim != 2:
        raise ValueError("embedding tables must be 2-D (rows, dim)")
    num_users, d = user_emb.shape
    num_items, d2 = item_emb.shape
    if d != d2:
        raise ValueError("user/item embedding dims must match")

    uidx = user_indices.astype(jnp.int32)
    iidx = item_indices.astype(jnp.int32)
    emb_dtype = jnp.promote_types(user_emb.dtype, item_emb.dtype)
    user_emb = user_emb.astype(emb_dtype)
    item_emb = item_emb.astype(emb_dtype)
    itemsize = jnp.dtype(emb_dtype).itemsize

    vmem_cap = _vmem_capacity_bytes()
    if fuse is None:
        # Fuse only when (a) tables are small enough that the one-hot MXU work
        # is cheaper than the HBM round trips it removes and everything fits
        # VMEM with headroom, and (b) the gather is bit-exact (<=16-bit
        # tables).  f32 tables keep the exact streaming path by default.
        table_vmem = 2 * (num_users + num_items) * d * itemsize
        small = max(num_users, num_items) <= 512 and table_vmem <= vmem_cap // 4
        exact = itemsize <= 2
        fuse = small and exact

    if fuse:
        return _mf_forward_fused(user_emb, item_emb, uidx, iidx, vmem_cap)
    return _mf_forward_streaming(user_emb, item_emb, uidx, iidx, vmem_cap)


if __name__ == "__main__":
    num_users, num_items, embedding_dim = 32, 24, 32
    batch = 8

    key = jax.random.PRNGKey(0)
    k_u, k_i, k_ui, k_ii = jax.random.split(key, 4)

    # Deterministic init mirroring nn.Embedding.weight.data.uniform_(0, 0.05)
    user_emb = jax.random.uniform(
        k_u, (num_users, embedding_dim), jnp.float32, minval=0.0, maxval=0.05)
    item_emb = jax.random.uniform(
        k_i, (num_items, embedding_dim), jnp.float32, minval=0.0, maxval=0.05)
    user_indices = jax.random.randint(k_ui, (batch,), 0, num_users, jnp.int32)
    item_indices = jax.random.randint(k_ii, (batch,), 0, num_items, jnp.int32)

    # ---- f32 tables: default (exact) streaming path --------------------
    rating = jax.block_until_ready(
        mf_forward(user_emb, item_emb, user_indices, item_indices))
    ref = jnp.sum(user_emb[user_indices] * item_emb[item_indices], axis=1)
    assert rating.shape == (batch,)
    assert rating.dtype == jnp.float32
    assert jnp.allclose(rating, ref, rtol=1e-6, atol=1e-6)

    # ---- bf16 tables: fused path (tables resident in VMEM, in-kernel
    # one-hot gather; exact for bf16, half the HBM bytes on v6e/v7x) ------
    user_emb_bf = user_emb.astype(jnp.bfloat16)
    item_emb_bf = item_emb.astype(jnp.bfloat16)
    rating_bf = jax.block_until_ready(
        mf_forward(user_emb_bf, item_emb_bf, user_indices, item_indices))
    ref_bf = jnp.sum(
        user_emb_bf[user_indices].astype(jnp.float32)
        * item_emb_bf[item_indices].astype(jnp.float32), axis=1)
    assert rating_bf.shape == (batch,)
    assert rating_bf.dtype == jnp.float32
    assert jnp.allclose(rating_bf, ref_bf, rtol=1e-5, atol=1e-7)

    print("KERNEL_OK")
</pallas_src>

<mosaic_0001>
module attributes {stable_mosaic.version = 11 : i64} {
  func.func @_mf_stream_kernel(%arg0: i32, %arg1: memref<32x32xf32, #tpu.memory_space<vmem>>, %arg2: memref<32x32xf32, #tpu.memory_space<vmem>>, %arg3: memref<32x1xf32, #tpu.memory_space<vmem>>) attributes {dimension_semantics = [#tpu.dimension_semantics<parallel>], iteration_bounds = array<i64: 1>, scalar_prefetch = 0 : i64, scratch_operands = 0 : i64, tpu.core_type = #tpu.core_type<tc>, window_params = [{transform_indices = @transform_0, window_bounds = array<i64: 32, 32>}, {transform_indices = @transform_1, window_bounds = array<i64: 32, 32>}, {transform_indices = @transform_2, window_bounds = array<i64: 32, 1>}]} {
    %c0 = arith.constant 0 : index
    %c0_0 = arith.constant 0 : index
    %0 = vector.load %arg1[%c0, %c0_0] : memref<32x32xf32, #tpu.memory_space<vmem>>, vector<32x32xf32>
    %c0_1 = arith.constant 0 : index
    %c0_2 = arith.constant 0 : index
    %1 = vector.load %arg2[%c0_1, %c0_2] : memref<32x32xf32, #tpu.memory_space<vmem>>, vector<32x32xf32>
    %2 = arith.mulf %0, %1 : vector<32x32xf32>
    %cst = arith.constant dense<0.000000e+00> : vector<32xf32>
    %3 = vector.multi_reduction <add>, %2, %cst [1] : vector<32x32xf32> to vector<32xf32>
    %4 = vector.shape_cast %3 : vector<32xf32> to vector<32x1xf32>
    %c0_3 = arith.constant 0 : index
    %c0_4 = arith.constant 0 : index
    %5 = vector.load %arg3[%c0_3, %c0_4] : memref<32x1xf32, #tpu.memory_space<vmem>>, vector<32x1xf32>
    tpu.vector_store %arg3[%c0_3, %c0_4], %4 {strides = array<i32>} : memref<32x1xf32, #tpu.memory_space<vmem>>, vector<32x1xf32>,
    return
  }
  func.func @transform_0(%arg0: i32) -> (i32, i32) {
    %c0_i32 = arith.constant 0 : i32
    %c0_i32_0 = arith.constant 0 : i32
    return %arg0, %c0_i32 : i32, i32
  }
  func.func @transform_1(%arg0: i32) -> (i32, i32) {
    %c0_i32 = arith.constant 0 : i32
    %c0_i32_0 = arith.constant 0 : i32
    return %arg0, %c0_i32 : i32, i32
  }
  func.func @transform_2(%arg0: i32) -> (i32, i32) {
    %c0_i32 = arith.constant 0 : i32
    %c0_i32_0 = arith.constant 0 : i32
    return %arg0, %c0_i32 : i32, i32
  }
}

</mosaic_0001>

<llo_original>
// kernel: tpu_custom_call.1
$region0: #{tpu_custom_call.1}
  #allocation0 [shape = 'u32[]', space=smem, size = 0x4, offset = 0x4, fixed_abs, tag = 'smem constant byte address 0x4 - core index']
  #allocation1 [shape = 'u32[144,128]{1,0:T(1,128)}', space=vmem, size = 0x12000, scoped, tag = 'internal scratch']
  %s0 = inlined_call_operand.hbm [shape: f32[32,32], index: 0, kind: input, shape index: {}]
  %s1 = inlined_call_operand.hbm [shape: f32[32,32], index: 1, kind: input, shape index: {}]
  %s2 = inlined_call_operand.vmem [shape: f32[32,1], index: 2, kind: output, shape index: {}]
  %s3 = sld [smem:[#allocation0]]
  $region26: #{tpu_custom_call.1} parent=0
    _
  %s5 = ssub.s32 1, %s3
  %s6 = scalar_select 0, %s5, %s3
  $region1: #{tpu_custom_call.1} parent=0
    #allocation2 [shape = 'u8[16384]{0}', space=vmem, size = 0x4000, scoped, tag = 'input window, operand 0, single buffered']
    #allocation3 [shape = 's32[1]{0}', space=sflag, size = 0x4, scoped, tag = 'scoped memory for tpu_custom_call.1']
    #allocation4 [shape = 'u8[16384]{0}', space=vmem, size = 0x4000, scoped, tag = 'input window, operand 1, single buffered']
    #allocation5 [shape = 's32[1]{0}', space=sflag, size = 0x4, scoped, tag = 'scoped memory for tpu_custom_call.1']
    %7 = vsyncpa [#allocation3], 0
    %8 = vsyncpa [#allocation5], 0
    // Predicated region
    $region2: #{tpu_custom_call.1} parent=1 // pred_check
      _
    $region3: #{tpu_custom_call.1} parent=1 // pred_check_branch
      %10 = sbr.rel (0) target = $region5
    $region4: #{tpu_custom_call.1} parent=1 // pred_region
      %s12 = ssub.s32 512, 512
      %13 = vsyncadd [#allocation3], %s12
      %s14 = sshll.u32 [#allocation2], 4
      %s15 = int_to_ptr.vmem [resolvable:$true] %s14
      %20 = dma.hbm_to_vmem [thread:$0]  %s0, 512, %s15, [#allocation3], 128, 128, 8
    $region5: #{tpu_custom_call.1} parent=1 // pred_fallthru
      _
    // Predicated region
    $region6: #{tpu_custom_call.1} parent=1 // pred_check
      _
    $region7: #{tpu_custom_call.1} parent=1 // pred_check_branch
      %22 = sbr.rel (0) target = $region9
    $region8: #{tpu_custom_call.1} parent=1 // pred_region
      %s24 = ssub.s32 512, 512
      %25 = vsyncadd [#allocation5], %s24
      %s26 = sshll.u32 [#allocation4], 4
      %s27 = int_to_ptr.vmem [resolvable:$true] %s26
      %32 = dma.hbm_to_vmem [thread:$0]  %s1, 512, %s27, [#allocation5], 128, 128, 8
    $region9: #{tpu_custom_call.1} parent=1 // pred_fallthru
      _
    // Predicated region
    $region10: #{tpu_custom_call.1} parent=1 // pred_check
      _
    $region11: #{tpu_custom_call.1} parent=1 // pred_check_branch
      %34 = sbr.rel (0) target = $region13
    $region12: #{tpu_custom_call.1} parent=1 // pred_region
      %35 = dma.done [#allocation3], 512
    $region13: #{tpu_custom_call.1} parent=1 // pred_fallthru
      _
    // Predicated region
    $region14: #{tpu_custom_call.1} parent=1 // pred_check
      _
    $region15: #{tpu_custom_call.1} parent=1 // pred_check_branch
      %37 = sbr.rel (0) target = $region17
    $region16: #{tpu_custom_call.1} parent=1 // pred_region
      %38 = dma.done [#allocation5], 512
    $region17: #{tpu_custom_call.1} parent=1 // pred_fallthru
      _
    %v39 = vld [vmem:[#allocation2] sm:$0xff]
    %v40 = vld [vmem:[#allocation2 + $0x8] sm:$0xff]
    %v41 = vld [vmem:[#allocation2 + $0x10] sm:$0xff]
    %v42 = vld [vmem:[#allocation2 + $0x18] sm:$0xff]
    %v43 = vld [vmem:[#allocation4] sm:$0xff]
    %v44 = vld [vmem:[#allocation4 + $0x8] sm:$0xff]
    %v45 = vld [vmem:[#allocation4 + $0x10] sm:$0xff]
    %v46 = vld [vmem:[#allocation4 + $0x18] sm:$0xff]
    %v47 = vmul.f32 %v39, %v43
    %v48 = vmul.f32 %v40, %v44
    %v49 = vmul.f32 %v41, %v45
    %v50 = vmul.f32 %v42, %v46
    %vm51 = vcmask 261120
    %v52 = vsel %vm51, %v47, 0.0
    %53 = vadd.xlane.f32.xlu0 %v52
    %v54 = vpop.xlane.xlu0 %53
    %v55 = vsel %vm51, %v48, 0.0
    %56 = vadd.xlane.f32.xlu0 %v55
    %v57 = vpop.xlane.xlu0 %56
    %v58 = vsel %vm51, %v49, 0.0
    %59 = vadd.xlane.f32.xlu0 %v58
    %v60 = vpop.xlane.xlu0 %59
    %v61 = vsel %vm51, %v50, 0.0
    %62 = vadd.xlane.f32.xlu0 %v61
    %v63 = vpop.xlane.xlu0 %62
    %vm64 = vcmask 7168
    %65 = vst.msk [vmem:[%s2] sm:$0xff] %vm64, %v54
    %66 = vst.msk [vmem:[%s2 + $0x8] sm:$0xff] %vm64, %v57
    %67 = vst.msk [vmem:[%s2 + $0x10] sm:$0xff] %vm64, %v60
    %68 = vst.msk [vmem:[%s2 + $0x18] sm:$0xff] %vm64, %v63
    // Predicated region
    $region18: #{tpu_custom_call.1} parent=1 // pred_check
      _
    $region19: #{tpu_custom_call.1} parent=1 // pred_check_branch
      %70 = sbr.rel (0) target = $region21
    $region20: #{tpu_custom_call.1} parent=1 // pred_region
      _
    $region21: #{tpu_custom_call.1} parent=1 // pred_fallthru
      _
    // Predicated region
    $region22: #{tpu_custom_call.1} parent=1 // pred_check
      _
    $region23: #{tpu_custom_call.1} parent=1 // pred_check_branch
      %72 = sbr.rel (0) target = $region25
    $region24: #{tpu_custom_call.1} parent=1 // pred_region
      _
    $region25: #{tpu_custom_call.1} parent=1 // pred_fallthru
      _
    %73 = vsyncpa [#allocation3], 1
    %74 = vsyncpa [#allocation5], 1

</llo_original>
